<compile_context>
chip_gen: v6e
topology: v6e:2x2x1
jax: 0.10.0
libtpu: 0.0.40
codegen_flags: <defaults>
</compile_context>

<pallas_src>
import functools

import jax
import jax.numpy as jnp
from jax import lax
from jax.experimental import pallas as pl
from jax.experimental.pallas import tpu as pltpu

_STAT_ROWS = 8   # rows [count, conf_sum, acc_sum, 0, ...] padded to 8 sublanes


def _round_up(x, m):
    return (x + m - 1) // m * m


def _ece_partial_kernel(logits_ref, labels_ref, part_ref, *,
                        n_bins: int, nb_pad: int, n_total: int, tile_n: int,
                        tiles_per_split: int):
    """Accumulate per-bin [count, conf_sum, acc_sum] for one (tile_n, C) tile.

    logits_ref: (tile_n, C)  natural row-major layout straight from HBM
    labels_ref: (tile_n, 1)  int32
    part_ref  : (8, nb_pad)  f32 resident accumulator (one block per split)
    """
    split = pl.program_id(0)
    tile = pl.program_id(1)

    logits = logits_ref[...].astype(jnp.float32)                 # (T, C)
    labels = labels_ref[...]                                     # (T, 1)
    t, c = logits.shape

    # confidence = max softmax prob = 1 / sum_j exp(x_j - max_j x)
    row_max = jnp.max(logits, axis=1, keepdims=True)             # (T, 1)
    denom = jnp.sum(jnp.exp(logits - row_max), axis=1, keepdims=True)
    conf = pl.reciprocal(denom, approx=False)   # exact: bin-boundary sensitive

    # prediction = first argmax (matches torch.max tie-break)
    col_idx = lax.broadcasted_iota(jnp.int32, (t, c), 1).astype(jnp.float32)
    pred = jnp.min(jnp.where(logits == row_max, col_idx, jnp.float32(c)),
                   axis=1, keepdims=True)                        # (T, 1)
    acc = (pred == labels.astype(jnp.float32)).astype(jnp.float32)

    # validity mask for the ragged last tile (no wrapper-side padding)
    base = (split * tiles_per_split + tile) * tile_n
    row = lax.broadcasted_iota(jnp.int32, (t, 1), 0)
    valid = (base + row) < n_total                               # (T, 1)
    conf = jnp.where(valid, conf, 0.0)       # also kills NaN from OOB reads

    # one-hot bin membership, bins on the lane axis: bin b is (b/n, (b+1)/n]
    bcol = lax.broadcasted_iota(jnp.int32, (1, nb_pad), 1).astype(jnp.float32)
    lo = bcol / jnp.float32(n_bins)
    hi = (bcol + 1.0) / jnp.float32(n_bins)
    one_hot = ((conf > lo) & (conf <= hi) & valid).astype(jnp.float32)

    # per-bin partial sums (cross-sublane reductions)
    count_row = jnp.sum(one_hot, axis=0, keepdims=True)          # (1, NB)
    conf_row = jnp.sum(one_hot * conf, axis=0, keepdims=True)    # (1, NB)
    acc_row = jnp.sum(one_hot * acc, axis=0, keepdims=True)      # (1, NB)

    srow = lax.broadcasted_iota(jnp.int32, (_STAT_ROWS, nb_pad), 0)
    partial = jnp.where(srow == 0, count_row,
                        jnp.where(srow == 1, conf_row,
                                  jnp.where(srow == 2, acc_row,
                                            jnp.float32(0.0))))

    @pl.when(tile == 0)
    def _():
        part_ref[...] = jnp.zeros_like(part_ref)

    part_ref[...] += partial


def ece_loss(logits, labels, n_bins: int = 15, *, n_split: int = 1,
             core_parallel: bool = False):
    """Expected Calibration Error. logits: (N, C) float, labels: (N,) int."""
    n, c = logits.shape
    nb_pad = _round_up(n_bins, 8)

    # tile_n from a VMEM budget: double-buffered (tile_n, C) f32 block whose
    # lane dim is padded to 128 in VMEM; keeps footprint v7x-safe (64 MiB).
    c_pad = _round_up(c, 128)
    tile_n = (8 * 1024 * 1024) // (2 * 4 * c_pad)
    tile_n = min(4096, max(128, tile_n))
    tile_n = min(tile_n, _round_up(n, 8))
    tile_n = max(8, (tile_n // 8) * 8)

    num_blocks = pl.cdiv(n, tile_n)
    tiles_per_split = pl.cdiv(num_blocks, n_split)
    last_block = num_blocks - 1

    labels2d = labels.astype(jnp.int32).reshape(n, 1)

    kernel = functools.partial(
        _ece_partial_kernel, n_bins=n_bins, nb_pad=nb_pad, n_total=n,
        tile_n=tile_n, tiles_per_split=tiles_per_split)

    def block_map(s, i):
        # Clamp so a pure-padding tile (possible when n_split > 1) maps onto a
        # real block; its contribution is zeroed by the in-kernel valid mask.
        return (jnp.minimum(s * tiles_per_split + i, last_block), 0)

    parts = pl.pallas_call(
        kernel,
        out_shape=jax.ShapeDtypeStruct((n_split, _STAT_ROWS, nb_pad),
                                       jnp.float32),
        grid_spec=pltpu.PrefetchScalarGridSpec(
            num_scalar_prefetch=0,
            grid=(n_split, tiles_per_split),
            in_specs=[
                pl.BlockSpec((tile_n, c), block_map),
                pl.BlockSpec((tile_n, 1), block_map),
            ],
            out_specs=pl.BlockSpec((None, _STAT_ROWS, nb_pad),
                                   lambda s, i: (s, 0, 0)),
        ),
        compiler_params=pltpu.CompilerParams(
            dimension_semantics=(
                pltpu.CORE_PARALLEL if core_parallel else pltpu.PARALLEL,
                pltpu.ARBITRARY),
            vmem_limit_bytes=48 * 1024 * 1024),
    )(logits, labels2d)

    # Finalize the non-additive part once, in plain JAX, on the tiny sums.
    total = jnp.sum(parts, axis=0)                 # combine splits/cores
    counts = total[0, :n_bins]
    conf_sums = total[1, :n_bins]
    acc_sums = total[2, :n_bins]
    prop = counts / jnp.float32(n)                 # weights use GLOBAL N
    safe = jnp.maximum(counts, 1.0)
    gap = jnp.abs(conf_sums / safe - acc_sums / safe)
    ece = jnp.sum(jnp.where(counts > 0, gap * prop, 0.0))
    return ece.reshape(1)


def _ece_reference(logits, labels, n_bins: int = 15):
    """Plain-JAX reference mirroring the PyTorch module."""
    softmaxes = jax.nn.softmax(logits.astype(jnp.float32), axis=1)
    confidences = jnp.max(softmaxes, axis=1)
    predictions = jnp.argmax(softmaxes, axis=1)
    accuracies = (predictions == labels).astype(jnp.float32)
    ece = jnp.zeros((1,), jnp.float32)
    bounds = [float(i) / n_bins for i in range(n_bins + 1)]
    for lo, hi in zip(bounds[:-1], bounds[1:]):
        in_bin = (confidences > lo) & (confidences <= hi)
        prop = jnp.mean(in_bin.astype(jnp.float32))
        cnt = jnp.sum(in_bin.astype(jnp.float32))
        safe = jnp.maximum(cnt, 1.0)
        acc_in = jnp.sum(accuracies * in_bin) / safe
        conf_in = jnp.sum(confidences * in_bin) / safe
        ece = ece + jnp.where(cnt > 0, jnp.abs(conf_in - acc_in) * prop, 0.0)
    return ece


if __name__ == "__main__":
    key = jax.random.PRNGKey(0)
    k_logits, k_labels = jax.random.split(key)

    N, C = 64, 8  # small synthetic classification problem
    logits = jax.random.normal(k_logits, (N, C), dtype=jnp.float32) * 3.0
    labels = jax.random.randint(k_labels, (N,), 0, C, dtype=jnp.int32)

    ece = ece_loss(logits, labels, n_bins=15)
    jax.block_until_ready(ece)

    ece_ref = _ece_reference(logits, labels, n_bins=15)
    assert ece.shape == (1,)
    assert jnp.allclose(ece, ece_ref, atol=1e-5, rtol=1e-5), (ece, ece_ref)

    print("KERNEL_OK")
</pallas_src>

<mosaic_0001>
module attributes {stable_mosaic.version = 11 : i64} {
  func.func @_ece_partial_kernel(%arg0: i32, %arg1: i32, %arg2: memref<64x8xf32, #tpu.memory_space<vmem>>, %arg3: memref<64x1xi32, #tpu.memory_space<vmem>>, %arg4: memref<1x8x16xf32, #tpu.memory_space<vmem>>) attributes {dimension_semantics = [#tpu.dimension_semantics<parallel>, #tpu.dimension_semantics<arbitrary>], iteration_bounds = array<i64: 1, 1>, scalar_prefetch = 0 : i64, scratch_operands = 0 : i64, tpu.core_type = #tpu.core_type<tc>, window_params = [{transform_indices = @transform_0, window_bounds = array<i64: 64, 8>}, {transform_indices = @transform_1, window_bounds = array<i64: 64, 1>}, {transform_indices = @transform_2, window_bounds = array<i64: 1, 8, 16>}]} {
    %c0 = arith.constant 0 : index
    %c0_0 = arith.constant 0 : index
    %0 = vector.load %arg2[%c0, %c0_0] : memref<64x8xf32, #tpu.memory_space<vmem>>, vector<64x8xf32>
    %c0_1 = arith.constant 0 : index
    %c0_2 = arith.constant 0 : index
    %1 = vector.load %arg3[%c0_1, %c0_2] : memref<64x1xi32, #tpu.memory_space<vmem>>, vector<64x1xi32>
    %cst = arith.constant dense<0xFF800000> : vector<64xf32>
    %2 = vector.multi_reduction <maximumf>, %0, %cst [1] : vector<64x8xf32> to vector<64xf32>
    %3 = vector.shape_cast %2 : vector<64xf32> to vector<64x1xf32>
    %4 = vector.broadcast %3 : vector<64x1xf32> to vector<64x8xf32>
    %5 = arith.subf %0, %4 : vector<64x8xf32>
    %6 = math.exp %5 : vector<64x8xf32>
    %cst_3 = arith.constant dense<0.000000e+00> : vector<64xf32>
    %7 = vector.multi_reduction <add>, %6, %cst_3 [1] : vector<64x8xf32> to vector<64xf32>
    %8 = vector.shape_cast %7 : vector<64xf32> to vector<64x1xf32>
    %9 = tpu.reciprocal %8 : vector<64x1xf32> -> vector<64x1xf32>
    %10 = tpu.iota {dimensions = array<i32: 1>} : vector<64x8xi32>
    %11 = arith.sitofp %10 : vector<64x8xi32> to vector<64x8xf32>
    %12 = vector.broadcast %3 : vector<64x1xf32> to vector<64x8xf32>
    %13 = arith.cmpf oeq, %0, %12 : vector<64x8xf32>
    %cst_4 = arith.constant 8.000000e+00 : f32
    %14 = vector.broadcast %cst_4 : f32 to vector<64x8xf32>
    %15 = arith.select %13, %11, %14 : vector<64x8xi1>, vector<64x8xf32>
    %cst_5 = arith.constant dense<0x7F800000> : vector<64xf32>
    %16 = vector.multi_reduction <minimumf>, %15, %cst_5 [1] : vector<64x8xf32> to vector<64xf32>
    %17 = vector.shape_cast %16 : vector<64xf32> to vector<64x1xf32>
    %18 = arith.sitofp %1 : vector<64x1xi32> to vector<64x1xf32>
    %19 = arith.cmpf oeq, %17, %18 : vector<64x1xf32>
    %20 = arith.extui %19 : vector<64x1xi1> to vector<64x1xi32>
    %21 = arith.sitofp %20 : vector<64x1xi32> to vector<64x1xf32>
    %c1_i32 = arith.constant 1 : i32
    %22 = arith.muli %arg0, %c1_i32 : i32
    %23 = arith.addi %22, %arg1 : i32
    %c64_i32 = arith.constant 64 : i32
    %24 = arith.muli %23, %c64_i32 : i32
    %25 = tpu.iota {dimensions = array<i32: 0>} : vector<64x1xi32>
    %26 = vector.broadcast %24 : i32 to vector<64x1xi32>
    %27 = arith.addi %26, %25 : vector<64x1xi32>
    %c64_i32_6 = arith.constant 64 : i32
    %28 = vector.broadcast %c64_i32_6 : i32 to vector<64x1xi32>
    %29 = arith.cmpi slt, %27, %28 : vector<64x1xi32>
    %cst_7 = arith.constant 0.000000e+00 : f32
    %30 = vector.broadcast %cst_7 : f32 to vector<64x1xf32>
    %31 = arith.select %29, %9, %30 : vector<64x1xi1>, vector<64x1xf32>
    %32 = tpu.iota {dimensions = array<i32: 1>} : vector<1x16xi32>
    %33 = arith.sitofp %32 : vector<1x16xi32> to vector<1x16xf32>
    %cst_8 = arith.constant 1.500000e+01 : f32
    %34 = vector.broadcast %cst_8 : f32 to vector<1x16xf32>
    %35 = arith.divf %33, %34 : vector<1x16xf32>
    %cst_9 = arith.constant 1.000000e+00 : f32
    %36 = vector.broadcast %cst_9 : f32 to vector<1x16xf32>
    %37 = arith.addf %33, %36 : vector<1x16xf32>
    %cst_10 = arith.constant 1.500000e+01 : f32
    %38 = vector.broadcast %cst_10 : f32 to vector<1x16xf32>
    %39 = arith.divf %37, %38 : vector<1x16xf32>
    %40 = vector.broadcast %31 : vector<64x1xf32> to vector<64x16xf32>
    %41 = vector.broadcast %35 : vector<1x16xf32> to vector<64x16xf32>
    %42 = arith.cmpf ogt, %40, %41 : vector<64x16xf32>
    %43 = vector.broadcast %31 : vector<64x1xf32> to vector<64x16xf32>
    %44 = vector.broadcast %39 : vector<1x16xf32> to vector<64x16xf32>
    %45 = arith.cmpf ole, %43, %44 : vector<64x16xf32>
    %46 = arith.andi %42, %45 : vector<64x16xi1>
    %47 = vector.broadcast %29 : vector<64x1xi1> to vector<64x16xi1>
    %48 = arith.andi %46, %47 : vector<64x16xi1>
    %49 = arith.extui %48 : vector<64x16xi1> to vector<64x16xi32>
    %50 = arith.sitofp %49 : vector<64x16xi32> to vector<64x16xf32>
    %cst_11 = arith.constant dense<0.000000e+00> : vector<16xf32>
    %51 = vector.multi_reduction <add>, %50, %cst_11 [0] : vector<64x16xf32> to vector<16xf32>
    %52 = vector.shape_cast %51 : vector<16xf32> to vector<1x16xf32>
    %53 = vector.broadcast %31 : vector<64x1xf32> to vector<64x16xf32>
    %54 = arith.mulf %50, %53 : vector<64x16xf32>
    %cst_12 = arith.constant dense<0.000000e+00> : vector<16xf32>
    %55 = vector.multi_reduction <add>, %54, %cst_12 [0] : vector<64x16xf32> to vector<16xf32>
    %56 = vector.shape_cast %55 : vector<16xf32> to vector<1x16xf32>
    %57 = vector.broadcast %21 : vector<64x1xf32> to vector<64x16xf32>
    %58 = arith.mulf %50, %57 : vector<64x16xf32>
    %cst_13 = arith.constant dense<0.000000e+00> : vector<16xf32>
    %59 = vector.multi_reduction <add>, %58, %cst_13 [0] : vector<64x16xf32> to vector<16xf32>
    %60 = vector.shape_cast %59 : vector<16xf32> to vector<1x16xf32>
    %61 = tpu.iota {dimensions = array<i32: 0>} : vector<8x16xi32>
    %c0_i32 = arith.constant 0 : i32
    %62 = vector.broadcast %c0_i32 : i32 to vector<8x16xi32>
    %63 = arith.cmpi eq, %61, %62 : vector<8x16xi32>
    %c1_i32_14 = arith.constant 1 : i32
    %64 = vector.broadcast %c1_i32_14 : i32 to vector<8x16xi32>
    %65 = arith.cmpi eq, %61, %64 : vector<8x16xi32>
    %c2_i32 = arith.constant 2 : i32
    %66 = vector.broadcast %c2_i32 : i32 to vector<8x16xi32>
    %67 = arith.cmpi eq, %61, %66 : vector<8x16xi32>
    %cst_15 = arith.constant 0.000000e+00 : f32
    %68 = vector.shape_cast %60 : vector<1x16xf32> to vector<1x16xf32>
    %69 = vector.broadcast %68 : vector<1x16xf32> to vector<8x16xf32>
    %70 = vector.broadcast %cst_15 : f32 to vector<8x16xf32>
    %71 = arith.select %67, %69, %70 : vector<8x16xi1>, vector<8x16xf32>
    %72 = vector.shape_cast %56 : vector<1x16xf32> to vector<1x16xf32>
    %73 = vector.broadcast %72 : vector<1x16xf32> to vector<8x16xf32>
    %74 = arith.select %65, %73, %71 : vector<8x16xi1>, vector<8x16xf32>
    %75 = vector.shape_cast %52 : vector<1x16xf32> to vector<1x16xf32>
    %76 = vector.broadcast %75 : vector<1x16xf32> to vector<8x16xf32>
    %77 = arith.select %63, %76, %74 : vector<8x16xi1>, vector<8x16xf32>
    %c0_i32_16 = arith.constant 0 : i32
    %78 = arith.cmpi eq, %arg1, %c0_i32_16 : i32
    %79 = arith.extui %78 : i1 to i32
    %c0_i32_17 = arith.constant 0 : i32
    %80 = arith.cmpi ne, %79, %c0_i32_17 : i32
    scf.if %80 {
      %cst_24 = arith.constant 0.000000e+00 : f32
      %87 = vector.broadcast %cst_24 : f32 to vector<8x16xf32>
      %c0_25 = arith.constant 0 : index
      %c0_26 = arith.constant 0 : index
      %c0_27 = arith.constant 0 : index
      %88 = vector.load %arg4[%c0_25, %c0_26, %c0_27] : memref<1x8x16xf32, #tpu.memory_space<vmem>>, vector<1x8x16xf32>
      %89 = vector.shape_cast %88 : vector<1x8x16xf32> to vector<8x16xf32>
      %90 = vector.shape_cast %87 : vector<8x16xf32> to vector<1x8x16xf32>
      tpu.vector_store %arg4[%c0_25, %c0_26, %c0_27], %90 {strides = array<i32>} : memref<1x8x16xf32, #tpu.memory_space<vmem>>, vector<1x8x16xf32>,
    } else {
    }
    %c0_18 = arith.constant 0 : index
    %c0_19 = arith.constant 0 : index
    %c0_20 = arith.constant 0 : index
    %81 = vector.load %arg4[%c0_18, %c0_19, %c0_20] : memref<1x8x16xf32, #tpu.memory_space<vmem>>, vector<1x8x16xf32>
    %82 = vector.shape_cast %81 : vector<1x8x16xf32> to vector<8x16xf32>
    %83 = arith.addf %82, %77 : vector<8x16xf32>
    %c0_21 = arith.constant 0 : index
    %c0_22 = arith.constant 0 : index
    %c0_23 = arith.constant 0 : index
    %84 = vector.load %arg4[%c0_21, %c0_22, %c0_23] : memref<1x8x16xf32, #tpu.memory_space<vmem>>, vector<1x8x16xf32>
    %85 = vector.shape_cast %84 : vector<1x8x16xf32> to vector<8x16xf32>
    %86 = vector.shape_cast %83 : vector<8x16xf32> to vector<1x8x16xf32>
    tpu.vector_store %arg4[%c0_21, %c0_22, %c0_23], %86 {strides = array<i32>} : memref<1x8x16xf32, #tpu.memory_space<vmem>>, vector<1x8x16xf32>,
    return
  }
  func.func @transform_0(%arg0: i32, %arg1: i32) -> (i32, i32) {
    %c1_i32 = arith.constant 1 : i32
    %0 = arith.muli %arg0, %c1_i32 : i32
    %1 = arith.addi %0, %arg1 : i32
    %c0_i32 = arith.constant 0 : i32
    %2 = arith.minsi %1, %c0_i32 : i32
    %c0_i32_0 = arith.constant 0 : i32
    %c0_i32_1 = arith.constant 0 : i32
    return %2, %c0_i32_0 : i32, i32
  }
  func.func @transform_1(%arg0: i32, %arg1: i32) -> (i32, i32) {
    %c1_i32 = arith.constant 1 : i32
    %0 = arith.muli %arg0, %c1_i32 : i32
    %1 = arith.addi %0, %arg1 : i32
    %c0_i32 = arith.constant 0 : i32
    %2 = arith.minsi %1, %c0_i32 : i32
    %c0_i32_0 = arith.constant 0 : i32
    %c0_i32_1 = arith.constant 0 : i32
    return %2, %c0_i32_0 : i32, i32
  }
  func.func @transform_2(%arg0: i32, %arg1: i32) -> (i32, i32, i32) {
    %c0_i32 = arith.constant 0 : i32
    %c0_i32_0 = arith.constant 0 : i32
    %c0_i32_1 = arith.constant 0 : i32
    return %arg0, %c0_i32, %c0_i32_0 : i32, i32, i32
  }
}

</mosaic_0001>

<llo_original>
// kernel: tpu_custom_call.1
$region0: #{tpu_custom_call.1}
  #allocation0 [shape = 'u32[]', space=smem, size = 0x4, offset = 0x4, fixed_abs, tag = 'smem constant byte address 0x4 - core index']
  #allocation1 [shape = 'u32[144,128]{1,0:T(1,128)}', space=vmem, size = 0x12000, scoped, tag = 'internal scratch']
  %s0 = inlined_call_operand.vmem [shape: f32[64,8], index: 0, kind: input, shape index: {}]
  %s1 = inlined_call_operand.vmem [shape: s32[64,1], index: 1, kind: input, shape index: {}]
  %s2 = inlined_call_operand.hbm [shape: f32[1,8,16], index: 2, kind: output, shape index: {}]
  %s3 = sld [smem:[#allocation0]]
  $region22: #{tpu_custom_call.1} parent=0
    _
  %s5 = ssub.s32 1, %s3
  %s6 = scalar_select 0, %s5, %s3
  $region1: #{tpu_custom_call.1} parent=0
    #allocation2 [shape = 'u8[4096]{0}', space=vmem, size = 0x1000, scoped, tag = 'output window, operand 0, single buffered']
    #allocation3 [shape = 's32[1]{0}', space=sflag, size = 0x4, scoped, tag = 'scoped memory for tpu_custom_call.1']
    %7 = vsyncpa [#allocation3], 0
    // Predicated region
    $region2: #{tpu_custom_call.1} parent=1 // pred_check
      _
    $region3: #{tpu_custom_call.1} parent=1 // pred_check_branch
      %9 = sbr.rel (0) target = $region5
    $region4: #{tpu_custom_call.1} parent=1 // pred_region
      %s10 = sadd.s32 0, 0
      %p11 = scmp.lt.s32.totalorder %s10, 0
      %s12 = scalar_select %p11, %s10, 0
      %s13 = smul.u32 8, %s12
      %p14 = scmp.lt.s32.totalorder %s13, 7
      %s15 = scalar_select %p14, %s13, 7
      %s16 = smul.addr %s15, 8
      %s17 = scalar_lea.vmem %s0, %s16
      %s18 = sadd.s32 0, 0
      %p19 = scmp.lt.s32.totalorder %s18, 0
      %s20 = scalar_select %p19, %s18, 0
      %s21 = smul.u32 8, %s20
    $region5: #{tpu_custom_call.1} parent=1 // pred_fallthru
      _
    // Predicated region
    $region6: #{tpu_custom_call.1} parent=1 // pred_check
      _
    $region7: #{tpu_custom_call.1} parent=1 // pred_check_branch
      %23 = sbr.rel (0) target = $region9
    $region8: #{tpu_custom_call.1} parent=1 // pred_region
      %s24 = sadd.s32 0, 0
      %p25 = scmp.lt.s32.totalorder %s24, 0
      %s26 = scalar_select %p25, %s24, 0
      %s27 = smul.u32 8, %s26
      %p28 = scmp.lt.s32.totalorder %s27, 7
      %s29 = scalar_select %p28, %s27, 7
      %s30 = smul.addr %s29, 8
      %s31 = scalar_lea.vmem %s1, %s30
      %s32 = sadd.s32 0, 0
      %p33 = scmp.lt.s32.totalorder %s32, 0
      %s34 = scalar_select %p33, %s32, 0
      %s35 = smul.u32 8, %s34
    $region9: #{tpu_custom_call.1} parent=1 // pred_fallthru
      _
    %s36 = sadd.s32 0, 0
    %p37 = scmp.lt.s32.totalorder %s36, 0
    %s38 = scalar_select %p37, %s36, 0
    %s39 = smul.u32 8, %s38
    %p40 = scmp.lt.s32.totalorder %s39, 7
    %s41 = scalar_select %p40, %s39, 7
    %s42 = smul.addr %s41, 8
    %s43 = scalar_lea.vmem %s0, %s42
    %s44 = sadd.s32 0, 0
    %p45 = scmp.lt.s32.totalorder %s44, 0
    %s46 = scalar_select %p45, %s44, 0
    %s47 = smul.u32 8, %s46
    %p48 = scmp.lt.s32.totalorder %s47, 7
    %s49 = scalar_select %p48, %s47, 7
    %s50 = smul.addr %s49, 8
    %s51 = scalar_lea.vmem %s1, %s50
    %s52 = sadd.s32 0, 0
    %p53 = scmp.lt.s32.totalorder %s52, 0
    %s54 = scalar_select %p53, %s52, 0
    %s55 = smul.u32 8, %s54
    %p56 = scmp.lt.s32.totalorder %s55, 7
    %s57 = scalar_select %p56, %s55, 7
    %s58 = smul.addr %s57, 8
    %s59 = scalar_lea.vmem %s0, %s58
    %s60 = sadd.s32 0, 0
    %p61 = scmp.lt.s32.totalorder %s60, 0
    %s62 = scalar_select %p61, %s60, 0
    %s63 = smul.u32 8, %s62
    %s64 = sadd.s32 0, 0
    %p65 = scmp.lt.s32.totalorder %s64, 0
    %s66 = scalar_select %p65, %s64, 0
    %s67 = smul.u32 8, %s66
    %p68 = scmp.lt.s32.totalorder %s67, 7
    %s69 = scalar_select %p68, %s67, 7
    %s70 = smul.addr %s69, 8
    %s71 = scalar_lea.vmem %s1, %s70
    %s72 = sadd.s32 0, 0
    %p73 = scmp.lt.s32.totalorder %s72, 0
    %s74 = scalar_select %p73, %s72, 0
    %s75 = smul.u32 8, %s74
    %v76 = vld [vmem:[%s59] sm:$0xff]
    %v77 = vld [vmem:[%s59 + $0x8] sm:$0xff]
    %v78 = vld [vmem:[%s59 + $0x10] sm:$0xff]
    %v79 = vld [vmem:[%s59 + $0x18] sm:$0xff]
    %v80 = vld [vmem:[%s59 + $0x20] sm:$0xff]
    %v81 = vld [vmem:[%s59 + $0x28] sm:$0xff]
    %v82 = vld [vmem:[%s59 + $0x30] sm:$0xff]
    %v83 = vld [vmem:[%s59 + $0x38] sm:$0xff]
    %v84 = vld [vmem:[%s71] sm:$0xff]
    %v85 = vld [vmem:[%s71 + $0x8] sm:$0xff]
    %v86 = vld [vmem:[%s71 + $0x10] sm:$0xff]
    %v87 = vld [vmem:[%s71 + $0x18] sm:$0xff]
    %v88 = vld [vmem:[%s71 + $0x20] sm:$0xff]
    %v89 = vld [vmem:[%s71 + $0x28] sm:$0xff]
    %v90 = vld [vmem:[%s71 + $0x30] sm:$0xff]
    %v91 = vld [vmem:[%s71 + $0x38] sm:$0xff]
    %vm92 = vcmask 64512
    %v93 = vsel %vm92, %v76, -inf
    %94 = vmax.xlane.f32.xlu0 %v93
    %v95 = vpop.xlane.xlu0 %94
    %v96 = vsel %vm92, %v77, -inf
    %97 = vmax.xlane.f32.xlu0 %v96
    %v98 = vpop.xlane.xlu0 %97
    %v99 = vsel %vm92, %v78, -inf
    %100 = vmax.xlane.f32.xlu0 %v99
    %v101 = vpop.xlane.xlu0 %100
    %v102 = vsel %vm92, %v79, -inf
    %103 = vmax.xlane.f32.xlu0 %v102
    %v104 = vpop.xlane.xlu0 %103
    %v105 = vsel %vm92, %v80, -inf
    %106 = vmax.xlane.f32.xlu0 %v105
    %v107 = vpop.xlane.xlu0 %106
    %v108 = vsel %vm92, %v81, -inf
    %109 = vmax.xlane.f32.xlu0 %v108
    %v110 = vpop.xlane.xlu0 %109
    %v111 = vsel %vm92, %v82, -inf
    %112 = vmax.xlane.f32.xlu0 %v111
    %v113 = vpop.xlane.xlu0 %112
    %v114 = vsel %vm92, %v83, -inf
    %115 = vmax.xlane.f32.xlu0 %v114
    %v116 = vpop.xlane.xlu0 %115
    %v117 = vsub.f32 %v76, %v95
    %v118 = vsub.f32 %v77, %v98
    %v119 = vsub.f32 %v78, %v101
    %v120 = vsub.f32 %v79, %v104
    %v121 = vsub.f32 %v80, %v107
    %v122 = vsub.f32 %v81, %v110
    %v123 = vsub.f32 %v82, %v113
    %v124 = vsub.f32 %v83, %v116
    %v125 = vmul.f32 %v117, 1.442695
    %v126 = vpow.pop %v125
    %v127 = vmul.f32 %v118, 1.442695
    %v128 = vpow.pop %v127
    %v129 = vmul.f32 %v119, 1.442695
    %v130 = vpow.pop %v129
    %v131 = vmul.f32 %v120, 1.442695
    %v132 = vpow.pop %v131
    %v133 = vmul.f32 %v121, 1.442695
    %v134 = vpow.pop %v133
    %v135 = vmul.f32 %v122, 1.442695
    %v136 = vpow.pop %v135
    %v137 = vmul.f32 %v123, 1.442695
    %v138 = vpow.pop %v137
    %v139 = vmul.f32 %v124, 1.442695
    %v140 = vpow.pop %v139
    %v141 = vsel %vm92, %v126, 0.0
    %142 = vadd.xlane.f32.xlu0 %v141
    %v143 = vpop.xlane.xlu0 %142
    %v144 = vsel %vm92, %v128, 0.0
    %145 = vadd.xlane.f32.xlu0 %v144
    %v146 = vpop.xlane.xlu0 %145
    %v147 = vsel %vm92, %v130, 0.0
    %148 = vadd.xlane.f32.xlu0 %v147
    %v149 = vpop.xlane.xlu0 %148
    %v150 = vsel %vm92, %v132, 0.0
    %151 = vadd.xlane.f32.xlu0 %v150
    %v152 = vpop.xlane.xlu0 %151
    %v153 = vsel %vm92, %v134, 0.0
    %154 = vadd.xlane.f32.xlu0 %v153
    %v155 = vpop.xlane.xlu0 %154
    %v156 = vsel %vm92, %v136, 0.0
    %157 = vadd.xlane.f32.xlu0 %v156
    %v158 = vpop.xlane.xlu0 %157
    %v159 = vsel %vm92, %v138, 0.0
    %160 = vadd.xlane.f32.xlu0 %v159
    %v161 = vpop.xlane.xlu0 %160
    %v162 = vsel %vm92, %v140, 0.0
    %163 = vadd.xlane.f32.xlu0 %v162
    %v164 = vpop.xlane.xlu0 %163
    %v165 = vrcp.pop %v143
    %v166 = vrcp.pop %v146
    %v167 = vrcp.pop %v149
    %v168 = vrcp.pop %v152
    %v169 = vrcp.pop %v155
    %v170 = vrcp.pop %v158
    %v171 = vrcp.pop %v161
    %v172 = vrcp.pop %v164
    %v173 = vlaneseq
    %v174 = vand.u32 %v173, 127
    %v175 = vcvt.s32.f32 %v174
    %vm176 = vcmp.eq.f32.partialorder %v76, %v95
    %vm177 = vcmp.eq.f32.partialorder %v77, %v98
    %vm178 = vcmp.eq.f32.partialorder %v78, %v101
    %vm179 = vcmp.eq.f32.partialorder %v79, %v104
    %vm180 = vcmp.eq.f32.partialorder %v80, %v107
    %vm181 = vcmp.eq.f32.partialorder %v81, %v110
    %vm182 = vcmp.eq.f32.partialorder %v82, %v113
    %vm183 = vcmp.eq.f32.partialorder %v83, %v116
    %v184 = vsel %vm176, %v175, 8.0
    %v185 = vsel %vm177, %v175, 8.0
    %v186 = vsel %vm178, %v175, 8.0
    %v187 = vsel %vm179, %v175, 8.0
    %v188 = vsel %vm180, %v175, 8.0
    %v189 = vsel %vm181, %v175, 8.0
    %v190 = vsel %vm182, %v175, 8.0
    %v191 = vsel %vm183, %v175, 8.0
    %v192 = vsel %vm92, %v184, inf
    %193 = vmin.xlane.f32.xlu0 %v192
    %v194 = vpop.xlane.xlu0 %193
    %v195 = vsel %vm92, %v185, inf
    %196 = vmin.xlane.f32.xlu0 %v195
    %v197 = vpop.xlane.xlu0 %196
    %v198 = vsel %vm92, %v186, inf
    %199 = vmin.xlane.f32.xlu0 %v198
    %v200 = vpop.xlane.xlu0 %199
    %v201 = vsel %vm92, %v187, inf
    %202 = vmin.xlane.f32.xlu0 %v201
    %v203 = vpop.xlane.xlu0 %202
    %v204 = vsel %vm92, %v188, inf
    %205 = vmin.xlane.f32.xlu0 %v204
    %v206 = vpop.xlane.xlu0 %205
    %v207 = vsel %vm92, %v189, inf
    %208 = vmin.xlane.f32.xlu0 %v207
    %v209 = vpop.xlane.xlu0 %208
    %v210 = vsel %vm92, %v190, inf
    %211 = vmin.xlane.f32.xlu0 %v210
    %v212 = vpop.xlane.xlu0 %211
    %v213 = vsel %vm92, %v191, inf
    %214 = vmin.xlane.f32.xlu0 %v213
    %v215 = vpop.xlane.xlu0 %214
    %v216 = vcvt.s32.f32 %v84
    %v217 = vcvt.s32.f32 %v85
    %v218 = vcvt.s32.f32 %v86
    %v219 = vcvt.s32.f32 %v87
    %v220 = vcvt.s32.f32 %v88
    %v221 = vcvt.s32.f32 %v89
    %v222 = vcvt.s32.f32 %v90
    %v223 = vcvt.s32.f32 %v91
    %vm224 = vcmp.eq.f32.partialorder %v194, %v216
    %vm225 = vcmp.eq.f32.partialorder %v197, %v217
    %vm226 = vcmp.eq.f32.partialorder %v200, %v218
    %vm227 = vcmp.eq.f32.partialorder %v203, %v219
    %vm228 = vcmp.eq.f32.partialorder %v206, %v220
    %vm229 = vcmp.eq.f32.partialorder %v209, %v221
    %vm230 = vcmp.eq.f32.partialorder %v212, %v222
    %vm231 = vcmp.eq.f32.partialorder %v215, %v223
    %v232 = vsel %vm224, 1, 0
    %v233 = vsel %vm225, 1, 0
    %v234 = vsel %vm226, 1, 0
    %v235 = vsel %vm227, 1, 0
    %v236 = vsel %vm228, 1, 0
    %v237 = vsel %vm229, 1, 0
    %v238 = vsel %vm230, 1, 0
    %v239 = vsel %vm231, 1, 0
    %v240 = vcvt.s32.f32 %v232
    %v241 = vcvt.s32.f32 %v233
    %v242 = vcvt.s32.f32 %v234
    %v243 = vcvt.s32.f32 %v235
    %v244 = vcvt.s32.f32 %v236
    %v245 = vcvt.s32.f32 %v237
    %v246 = vcvt.s32.f32 %v238
    %v247 = vcvt.s32.f32 %v239
    %s248 = sadd.s32 0, 0
    %s249 = smul.u32 %s248, 64
    %v250 = vlaneseq
    %v251 = vshrl.u32 %v250, 7
    %v252 = vadd.s32 %v251, 8
    %v253 = vadd.s32 %v251, 16
    %v254 = vadd.s32 %v251, 24
    %v255 = vadd.s32 %v251, 32
    %v256 = vadd.s32 %v251, 40
    %v257 = vadd.s32 %v251, 48
    %v258 = vadd.s32 %v251, 56
    %v259 = vstv %s249
    %v260 = vadd.s32 %v259, %v251
    %v261 = vadd.s32 %v259, %v252
    %v262 = vadd.s32 %v259, %v253
    %v263 = vadd.s32 %v259, %v254
    %v264 = vadd.s32 %v259, %v255
    %v265 = vadd.s32 %v259, %v256
    %v266 = vadd.s32 %v259, %v257
    %v267 = vadd.s32 %v259, %v258
    %vm268 = vcmp.lt.s32.totalorder %v260, 64
    %vm269 = vcmp.lt.s32.totalorder %v261, 64
    %vm270 = vcmp.lt.s32.totalorder %v262, 64
    %vm271 = vcmp.lt.s32.totalorder %v263, 64
    %vm272 = vcmp.lt.s32.totalorder %v264, 64
    %vm273 = vcmp.lt.s32.totalorder %v265, 64
    %vm274 = vcmp.lt.s32.totalorder %v266, 64
    %vm275 = vcmp.lt.s32.totalorder %v267, 64
    %v276 = vsel %vm268, %v165, 0.0
    %v277 = vsel %vm269, %v166, 0.0
    %v278 = vsel %vm270, %v167, 0.0
    %v279 = vsel %vm271, %v168, 0.0
    %v280 = vsel %vm272, %v169, 0.0
    %v281 = vsel %vm273, %v170, 0.0
    %v282 = vsel %vm274, %v171, 0.0
    %v283 = vsel %vm275, %v172, 0.0
    %v284 = vrcp.pop 15.0
    %v285 = vmul.f32 %v175, %v284
    %v286 = vadd.f32 %v175, 1.0
    %v287 = vmul.f32 %v286, %v284
    %vm288 = vcmp.gt.f32.partialorder %v276, %v285
    %vm289 = vcmp.gt.f32.partialorder %v277, %v285
    %vm290 = vcmp.gt.f32.partialorder %v278, %v285
    %vm291 = vcmp.gt.f32.partialorder %v279, %v285
    %vm292 = vcmp.gt.f32.partialorder %v280, %v285
    %vm293 = vcmp.gt.f32.partialorder %v281, %v285
    %vm294 = vcmp.gt.f32.partialorder %v282, %v285
    %vm295 = vcmp.gt.f32.partialorder %v283, %v285
    %vm296 = vcmp.le.f32.partialorder %v276, %v287
    %vm297 = vcmp.le.f32.partialorder %v277, %v287
    %vm298 = vcmp.le.f32.partialorder %v278, %v287
    %vm299 = vcmp.le.f32.partialorder %v279, %v287
    %vm300 = vcmp.le.f32.partialorder %v280, %v287
    %vm301 = vcmp.le.f32.partialorder %v281, %v287
    %vm302 = vcmp.le.f32.partialorder %v282, %v287
    %vm303 = vcmp.le.f32.partialorder %v283, %v287
    %vm304 = vmand %vm288, %vm296
    %vm305 = vmand %vm289, %vm297
    %vm306 = vmand %vm290, %vm298
    %vm307 = vmand %vm291, %vm299
    %vm308 = vmand %vm292, %vm300
    %vm309 = vmand %vm293, %vm301
    %vm310 = vmand %vm294, %vm302
    %vm311 = vmand %vm295, %vm303
    %v312 = vsel %vm268, 1, 0
    %v313 = vsel %vm269, 1, 0
    %v314 = vsel %vm270, 1, 0
    %v315 = vsel %vm271, 1, 0
    %v316 = vsel %vm272, 1, 0
    %v317 = vsel %vm273, 1, 0
    %v318 = vsel %vm274, 1, 0
    %v319 = vsel %vm275, 1, 0
    %vm320 = vcmp.eq.s32.totalorder %v312, 1
    %vm321 = vcmp.eq.s32.totalorder %v313, 1
    %vm322 = vcmp.eq.s32.totalorder %v314, 1
    %vm323 = vcmp.eq.s32.totalorder %v315, 1
    %vm324 = vcmp.eq.s32.totalorder %v316, 1
    %vm325 = vcmp.eq.s32.totalorder %v317, 1
    %vm326 = vcmp.eq.s32.totalorder %v318, 1
    %vm327 = vcmp.eq.s32.totalorder %v319, 1
    %vm328 = vmand %vm304, %vm320
    %vm329 = vmand %vm305, %vm321
    %vm330 = vmand %vm306, %vm322
    %vm331 = vmand %vm307, %vm323
    %vm332 = vmand %vm308, %vm324
    %vm333 = vmand %vm309, %vm325
    %vm334 = vmand %vm310, %vm326
    %vm335 = vmand %vm311, %vm327
    %v336 = vsel %vm328, 1, 0
    %v337 = vsel %vm329, 1, 0
    %v338 = vsel %vm330, 1, 0
    %v339 = vsel %vm331, 1, 0
    %v340 = vsel %vm332, 1, 0
    %v341 = vsel %vm333, 1, 0
    %v342 = vsel %vm334, 1, 0
    %v343 = vsel %vm335, 1, 0
    %v344 = vcvt.s32.f32 %v336
    %v345 = vcvt.s32.f32 %v337
    %v346 = vcvt.s32.f32 %v338
    %v347 = vcvt.s32.f32 %v339
    %v348 = vcvt.s32.f32 %v340
    %v349 = vcvt.s32.f32 %v341
    %v350 = vcvt.s32.f32 %v342
    %v351 = vcvt.s32.f32 %v343
    %vm352 = vcmask 130048
    %v353 = vsel %vm352, %v344, 0.0
    %v354 = vsel %vm352, %v345, 0.0
    %v355 = vadd.f32 %v353, %v354
    %v356 = vsel %vm352, %v346, 0.0
    %v357 = vadd.f32 %v355, %v356
    %v358 = vsel %vm352, %v347, 0.0
    %v359 = vadd.f32 %v357, %v358
    %v360 = vsel %vm352, %v348, 0.0
    %v361 = vadd.f32 %v359, %v360
    %v362 = vsel %vm352, %v349, 0.0
    %v363 = vadd.f32 %v361, %v362
    %v364 = vsel %vm352, %v350, 0.0
    %v365 = vadd.f32 %v363, %v364
    %v366 = vsel %vm352, %v351, 0.0
    %v367 = vadd.f32 %v365, %v366
    %v368 = vrot.slane %v367, 4
    %v369 = vadd.f32 %v367, %v368
    %v370 = vrot.slane %v369, 2
    %v371 = vadd.f32 %v369, %v370
    %v372 = vrot.slane %v371, 1
    %v373 = vadd.f32 %v371, %v372
    %v374 = vmul.f32 %v344, %v276
    %v375 = vmul.f32 %v345, %v277
    %v376 = vmul.f32 %v346, %v278
    %v377 = vmul.f32 %v347, %v279
    %v378 = vmul.f32 %v348, %v280
    %v379 = vmul.f32 %v349, %v281
    %v380 = vmul.f32 %v350, %v282
    %v381 = vmul.f32 %v351, %v283
    %v382 = vsel %vm352, %v374, 0.0
    %v383 = vsel %vm352, %v375, 0.0
    %v384 = vadd.f32 %v382, %v383
    %v385 = vsel %vm352, %v376, 0.0
    %v386 = vadd.f32 %v384, %v385
    %v387 = vsel %vm352, %v377, 0.0
    %v388 = vadd.f32 %v386, %v387
    %v389 = vsel %vm352, %v378, 0.0
    %v390 = vadd.f32 %v388, %v389
    %v391 = vsel %vm352, %v379, 0.0
    %v392 = vadd.f32 %v390, %v391
    %v393 = vsel %vm352, %v380, 0.0
    %v394 = vadd.f32 %v392, %v393
    %v395 = vsel %vm352, %v381, 0.0
    %v396 = vadd.f32 %v394, %v395
    %v397 = vrot.slane %v396, 4
    %v398 = vadd.f32 %v396, %v397
    %v399 = vrot.slane %v398, 2
    %v400 = vadd.f32 %v398, %v399
    %v401 = vrot.slane %v400, 1
    %v402 = vadd.f32 %v400, %v401
    %404 = vset.pattern.permute.xlu0 0
    %405 = vperm.xlu0 %404, %v240
    %v406 = vpop.permute.xlu0 %405
    %409 = vset.pattern.permute.xlu0 0
    %410 = vperm.xlu0 %409, %v241
    %v411 = vpop.permute.xlu0 %410
    %414 = vset.pattern.permute.xlu0 0
    %415 = vperm.xlu0 %414, %v242
    %v416 = vpop.permute.xlu0 %415
    %419 = vset.pattern.permute.xlu0 0
    %420 = vperm.xlu0 %419, %v243
    %v421 = vpop.permute.xlu0 %420
    %424 = vset.pattern.permute.xlu0 0
    %425 = vperm.xlu0 %424, %v244
    %v426 = vpop.permute.xlu0 %425
    %429 = vset.pattern.permute.xlu0 0
    %430 = vperm.xlu0 %429, %v245
    %v431 = vpop.permute.xlu0 %430
    %434 = vset.pattern.permute.xlu0 0
    %435 = vperm.xlu0 %434, %v246
    %v436 = vpop.permute.xlu0 %435
    %439 = vset.pattern.permute.xlu0 0
    %440 = vperm.xlu0 %439, %v247
    %v441 = vpop.permute.xlu0 %440
    %v443 = vmul.f32 %v344, %v406
    %v444 = vmul.f32 %v345, %v411
    %v445 = vmul.f32 %v346, %v416
    %v446 = vmul.f32 %v347, %v421
    %v447 = vmul.f32 %v348, %v426
    %v448 = vmul.f32 %v349, %v431
    %v449 = vmul.f32 %v350, %v436
    %v450 = vmul.f32 %v351, %v441
    %v451 = vsel %vm352, %v443, 0.0
    %v452 = vsel %vm352, %v444, 0.0
    %v453 = vadd.f32 %v451, %v452
    %v454 = vsel %vm352, %v445, 0.0
    %v455 = vadd.f32 %v453, %v454
    %v456 = vsel %vm352, %v446, 0.0
    %v457 = vadd.f32 %v455, %v456
    %v458 = vsel %vm352, %v447, 0.0
    %v459 = vadd.f32 %v457, %v458
    %v460 = vsel %vm352, %v448, 0.0
    %v461 = vadd.f32 %v459, %v460
    %v462 = vsel %vm352, %v449, 0.0
    %v463 = vadd.f32 %v461, %v462
    %v464 = vsel %vm352, %v450, 0.0
    %v465 = vadd.f32 %v463, %v464
    %v466 = vrot.slane %v465, 4
    %v467 = vadd.f32 %v465, %v466
    %v468 = vrot.slane %v467, 2
    %v469 = vadd.f32 %v467, %v468
    %v470 = vrot.slane %v469, 1
    %v471 = vadd.f32 %v469, %v470
    %vm472 = vcmp.eq.s32.totalorder %v251, 0
    %vm473 = vcmp.eq.s32.totalorder %v251, 1
    %vm474 = vcmp.eq.s32.totalorder %v251, 2
    %v475 = vsel %vm474, %v471, 0.0
    %v476 = vsel %vm473, %v402, %v475
    %v477 = vsel %vm472, %v373, %v476
    %p478 = scmp.eq.s32.totalorder 0, 0
    // Predicated region
    $region10: #{tpu_custom_call.1} parent=1 // pred_check
      %p479 = pneg %p478
    $region11: #{tpu_custom_call.1} parent=1 // pred_check_branch
      %481 = sbr.rel (%p479) target = $region13
    $region12: #{tpu_custom_call.1} parent=1 // pred_region
      %482 = vst.msk [vmem:[#allocation2] sm:$0xff] %vm352, 0.0
    $region13: #{tpu_custom_call.1} parent=1 // pred_fallthru
      _
    %v483 = vld [vmem:[#allocation2] sm:$0xff]
    %v484 = vadd.f32 %v483, %v477
    %485 = vst.msk [vmem:[#allocation2] sm:$0xff] %vm352, %v484
    // Predicated region
    $region14: #{tpu_custom_call.1} parent=1 // pred_check
      _
    $region15: #{tpu_custom_call.1} parent=1 // pred_check_branch
      %487 = sbr.rel (0) target = $region17
    $region16: #{tpu_custom_call.1} parent=1 // pred_region
      %s489 = ssub.s32 128, 128
      %490 = vsyncadd [#allocation3], %s489
      %s492 = sshll.u32 [#allocation2], 4
      %s493 = int_to_ptr.vmem [resolvable:$true] %s492
      %495 = dma.vmem_to_hbm [thread:$0]  %s493, 128, %s2, [#allocation3]
    $region17: #{tpu_custom_call.1} parent=1 // pred_fallthru
      _
    // Predicated region
    $region18: #{tpu_custom_call.1} parent=1 // pred_check
      _
    $region19: #{tpu_custom_call.1} parent=1 // pred_check_branch
      %497 = sbr.rel (0) target = $region21
    $region20: #{tpu_custom_call.1} parent=1 // pred_region
      %498 = dma.done [#allocation3], 128
    $region21: #{tpu_custom_call.1} parent=1 // pred_fallthru
      _
    %499 = vsyncpa [#allocation3], 1

</llo_original>
